<compile_context>
chip_gen: v5e
topology: v5e:2x2
jax: 0.10.0
libtpu: 0.0.40
codegen_flags: <defaults>
</compile_context>

<pallas_src>
import functools

import jax
import jax.numpy as jnp
from jax.experimental import pallas as pl
from jax.experimental.pallas import tpu as pltpu


def _round_up(x, m):
    return (x + m - 1) // m * m


def _pick_tile(total, target):
    """Largest multiple-of-128 divisor of `total` (a 128 multiple) that is <= target."""
    t = min(max(target // 128, 1) * 128, total)
    while total % t:
        t -= 128
    return t


def _device_defaults():
    """Per-generation tile sizes and VMEM budgets."""
    try:
        kind = jax.devices()[0].device_kind.lower()
    except Exception:  # pragma: no cover - defensive
        kind = ""
    if "v7" in kind or "tpu7" in kind or "7x" in kind:
        # 64 MiB VMEM per TC, 2 TCs per chip -> conservative cap, ensure 2 slices.
        return dict(tm=256, tk=512, tn=1024, vmem_cap=52 << 20, two_tc=True)
    if "v6" in kind:
        # 128 MiB VMEM, highest compute/BW ratio -> biggest tiles.
        return dict(tm=512, tk=512, tn=2048, vmem_cap=96 << 20, two_tc=False)
    if "v5" in kind:
        return dict(tm=384, tk=256, tn=2048, vmem_cap=80 << 20, two_tc=False)
    # Unknown generation: conservative.
    return dict(tm=256, tk=256, tn=1024, vmem_cap=48 << 20, two_tc=False)


def _mlp_kernel(x_ref, w1_ref, b1_ref, w2_ref, b2_ref, o_ref, acc_ref, *,
                gelu_approximate):
    """One (token-tile i, c_out-tile j, hidden-tile k) step of fc1 -> GELU -> fc2."""
    k = pl.program_id(2)
    last = pl.num_programs(2) - 1

    @pl.when(k == 0)
    def _():
        acc_ref[...] = jnp.zeros_like(acc_ref)

    # fc1 for this hidden slice: (tm, C_in) @ (C_in, tk) -> f32 (tm, tk), + b1, GELU.
    h = jnp.dot(x_ref[...], w1_ref[...], preferred_element_type=jnp.float32)
    # approximate=True -> tanh (EUP slot, ~free); False -> erf parity with nn.GELU().
    h = jax.nn.gelu(h + b1_ref[...], approximate=gelu_approximate)

    # fc2 partial product for this hidden slice.
    part = jnp.dot(h.astype(w2_ref.dtype), w2_ref[...],
                   preferred_element_type=jnp.float32)

    @pl.when(k != last)
    def _():
        acc_ref[...] += part

    @pl.when(k == last)
    def _():
        # Fused final accumulate + bias + cast + store: saves one (tm, tn) f32 RMW.
        o_ref[...] = (acc_ref[...] + part + b2_ref[...]).astype(o_ref.dtype)


def pad_mlp_params(params):
    """One-time (outside the hot path) lane padding of weights to 128 multiples."""
    w1, b1, w2, b2 = params["w1"], params["b1"], params["w2"], params["b2"]
    hidden, c_out = w1.shape[1], w2.shape[1]
    h_pad, co_pad = _round_up(hidden, 128), _round_up(c_out, 128)
    if h_pad != hidden:
        w1 = jnp.pad(w1, ((0, 0), (0, h_pad - hidden)))
        b1 = jnp.pad(b1, ((0, 0), (0, h_pad - hidden)))
        w2 = jnp.pad(w2, ((0, h_pad - hidden), (0, 0)))
    if co_pad != c_out:
        w2 = jnp.pad(w2, ((0, 0), (0, co_pad - c_out)))
        b2 = jnp.pad(b2, ((0, 0), (0, co_pad - c_out)))
    return {"w1": w1, "b1": b1, "w2": w2, "b2": b2, "c_out": c_out}


def mlp_pallas(x, w1, b1, w2, b2, *, c_out=None, tm=None, tk=None, tn=None,
               vmem_cap_bytes=None, gelu_approximate=True, matmul_dtype=None):
    """x: [M, C_in]; w1: [C_in, H]; b1: [1, H]; w2: [H, C_out']; b2: [1, C_out'].

    `c_out` is the logical output width (<= w2.shape[1] if weights were pre-padded).
    """
    M, c_in = x.shape
    hidden = w1.shape[1]
    co_total = w2.shape[1]
    c_out = co_total if c_out is None else c_out
    out_dtype = x.dtype

    defaults = _device_defaults()
    tm = defaults["tm"] if tm is None else tm
    tk = defaults["tk"] if tk is None else tk
    tn = defaults["tn"] if tn is None else tn
    vmem_cap = defaults["vmem_cap"] if vmem_cap_bytes is None else vmem_cap_bytes

    # Optional bf16 compute path (f32 matmul runs multi-pass on the MXU).
    if matmul_dtype is not None and x.dtype != matmul_dtype:
        x = x.astype(matmul_dtype)
        w1 = w1.astype(matmul_dtype)
        w2 = w2.astype(matmul_dtype)
    compute_dtype = x.dtype
    bpe = jnp.dtype(compute_dtype).itemsize

    # ---- lane-dense 128-multiple padding (no-op if pad_mlp_params was used) ----
    h_pad = _round_up(hidden, 128)
    co_pad = _round_up(co_total, 128)
    if h_pad != hidden:
        w1 = jnp.pad(w1, ((0, 0), (0, h_pad - hidden)))
        b1 = jnp.pad(b1, ((0, 0), (0, h_pad - hidden)))
        w2 = jnp.pad(w2, ((0, h_pad - hidden), (0, 0)))
    if co_pad != co_total:
        w2 = jnp.pad(w2, ((0, 0), (0, co_pad - co_total)))
        b2 = jnp.pad(b2, ((0, 0), (0, co_pad - co_total)))

    # ---- tile selection (respect (8,128) f32 / (16,128) bf16 min tiles) ----
    sub = 16 if compute_dtype == jnp.bfloat16 else 8
    tm_eff = max(sub, (min(tm, _round_up(M, sub)) // sub) * sub)
    m_pad = _round_up(M, tm_eff)
    tk_eff = _pick_tile(h_pad, tk)
    tn_eff = _pick_tile(co_pad, tn)

    # v7x: with a single token tile, split c_out so both TensorCores get work.
    if (defaults["two_tc"] and (m_pad // tm_eff) < 2
            and tn_eff == co_pad and co_pad >= 256):
        tn_eff = _pick_tile(co_pad, co_pad // 2)

    # ---- VMEM budget: est + fixed margin (never over-request the physical VMEM) ----
    def vmem_bytes(tm_, tk_, tn_):
        # double-buffered input/output blocks (biases pad to 8 sublanes) + f32 acc.
        blocks = (tm_ * c_in + c_in * tk_ + 8 * tk_
                  + tk_ * tn_ + 8 * tn_ + tm_ * tn_)
        return 2 * bpe * blocks + 4 * tm_ * tn_

    margin = 4 << 20
    budget = max(vmem_cap - margin, 8 << 20)
    for _ in range(32):
        if vmem_bytes(tm_eff, tk_eff, tn_eff) <= budget:
            break
        if tn_eff > 128:
            tn_eff = _pick_tile(co_pad, tn_eff // 2)
        elif tk_eff > 128:
            tk_eff = _pick_tile(h_pad, tk_eff // 2)
        elif tm_eff > sub:
            tm_eff = max(sub, _round_up(tm_eff // 2, sub))
            m_pad = _round_up(M, tm_eff)
        else:
            break
    vmem_limit = int(min(vmem_cap, vmem_bytes(tm_eff, tk_eff, tn_eff) + margin))

    # TODO(synk): avoid padding x along M for shapes where tm does not divide M
    # (mask the last token tile instead); padded rows contribute exactly zero.
    xp = x if m_pad == M else jnp.pad(x, ((0, m_pad - M), (0, 0)))

    nm, nn, nk = m_pad // tm_eff, co_pad // tn_eff, h_pad // tk_eff
    grid = (nm, nn, nk)

    # Honest cost hint: weights are re-streamed per token (and per c_out) tile.
    cost = pl.CostEstimate(
        flops=2 * m_pad * h_pad * (c_in * nn + co_pad),
        transcendentals=m_pad * h_pad * nn,
        bytes_accessed=bpe * (m_pad * c_in
                              + nm * nn * (c_in * h_pad + h_pad)   # w1, b1 re-reads
                              + nm * (h_pad * co_pad)              # w2 re-reads
                              + nm * co_pad                        # b2 re-reads
                              + m_pad * co_pad),                   # output write
    )

    kernel = functools.partial(_mlp_kernel, gelu_approximate=gelu_approximate)

    out = pl.pallas_call(
        kernel,
        out_shape=jax.ShapeDtypeStruct((m_pad, co_pad), out_dtype),
        grid_spec=pltpu.PrefetchScalarGridSpec(
            num_scalar_prefetch=0,
            grid=grid,
            in_specs=[
                pl.BlockSpec((tm_eff, c_in), lambda i, j, k: (i, 0)),    # x tile
                # TODO(synk): on v5e, add pipeline_mode=pl.Buffered(3) to the w1/w2
                # specs if profiling shows exposed weight DMA at the chosen tm.
                pl.BlockSpec((c_in, tk_eff), lambda i, j, k: (0, k)),    # w1 slice
                pl.BlockSpec((1, tk_eff), lambda i, j, k: (0, k)),       # b1 slice
                pl.BlockSpec((tk_eff, tn_eff), lambda i, j, k: (k, j)),  # w2 slice
                pl.BlockSpec((1, tn_eff), lambda i, j, k: (0, j)),       # b2 slice
            ],
            out_specs=pl.BlockSpec((tm_eff, tn_eff), lambda i, j, k: (i, j)),
            scratch_shapes=[pltpu.VMEM((tm_eff, tn_eff), jnp.float32)],
        ),
        compiler_params=pltpu.CompilerParams(
            dimension_semantics=("parallel", "parallel", "arbitrary"),
            vmem_limit_bytes=vmem_limit,
        ),
        cost_estimate=cost,
    )(xp, w1, b1, w2, b2)

    return out[:M, :c_out]


def mlp_forward(x_btc, params, **kwargs):
    """x_btc: [B, N, C_in] (tokens).  `params` may be raw or pad_mlp_params output."""
    b, n, c = x_btc.shape
    c_out = params.get("c_out", params["w2"].shape[1])
    x2d = x_btc.reshape(b * n, c)
    out2d = mlp_pallas(x2d, params["w1"], params["b1"], params["w2"], params["b2"],
                       c_out=c_out, **kwargs)
    return out2d.reshape(b, n, c_out)


def init_mlp_params(key, in_features, hidden_features=None, out_features=None,
                    dtype=jnp.float32):
    out_features = out_features or in_features
    hidden_features = hidden_features or in_features
    k1, k2, k3, k4 = jax.random.split(key, 4)
    s1 = 1.0 / jnp.sqrt(in_features)
    s2 = 1.0 / jnp.sqrt(hidden_features)
    return {
        "w1": jax.random.uniform(k1, (in_features, hidden_features), dtype, -s1, s1),
        "b1": jax.random.uniform(k2, (1, hidden_features), dtype, -s1, s1),
        "w2": jax.random.uniform(k3, (hidden_features, out_features), dtype, -s2, s2),
        "b2": jax.random.uniform(k4, (1, out_features), dtype, -s2, s2),
    }


if __name__ == "__main__":
    key = jax.random.PRNGKey(0)
    kx, kp = jax.random.split(key)

    B, N, C_IN, HIDDEN = 2, 8, 32, 64            # out_features defaults to in_features
    x = jax.random.normal(kx, (B, N, C_IN), dtype=jnp.float32)
    raw_params = init_mlp_params(kp, C_IN, HIDDEN)
    params = pad_mlp_params(raw_params)          # one-time padding, outside hot path

    # Fast path: tanh GELU (default).
    out_tanh = jax.block_until_ready(mlp_forward(x, params))
    ref_tanh = jax.nn.gelu(x @ raw_params["w1"] + raw_params["b1"][0], approximate=True)
    ref_tanh = ref_tanh @ raw_params["w2"] + raw_params["b2"][0]
    assert out_tanh.shape == (B, N, C_IN)
    assert jnp.allclose(out_tanh, ref_tanh, atol=1e-4, rtol=1e-4)

    # Exact-parity path with nn.GELU()'s erf default.
    out_erf = jax.block_until_ready(mlp_forward(x, params, gelu_approximate=False))
    ref_erf = jax.nn.gelu(x @ raw_params["w1"] + raw_params["b1"][0], approximate=False)
    ref_erf = ref_erf @ raw_params["w2"] + raw_params["b2"][0]
    assert jnp.allclose(out_erf, ref_erf, atol=1e-4, rtol=1e-4)

    print("KERNEL_OK")
</pallas_src>

<mosaic_0001>
module attributes {stable_mosaic.version = 11 : i64} {
  func.func @_mlp_kernel(%arg0: i32, %arg1: i32, %arg2: i32, %arg3: memref<16x32xf32, #tpu.memory_space<vmem>>, %arg4: memref<32x128xf32, #tpu.memory_space<vmem>>, %arg5: memref<1x128xf32, #tpu.memory_space<vmem>>, %arg6: memref<128x128xf32, #tpu.memory_space<vmem>>, %arg7: memref<1x128xf32, #tpu.memory_space<vmem>>, %arg8: memref<16x128xf32, #tpu.memory_space<vmem>>, %arg9: memref<16x128xf32, #tpu.memory_space<vmem>>) attributes {dimension_semantics = [#tpu.dimension_semantics<parallel>, #tpu.dimension_semantics<parallel>, #tpu.dimension_semantics<arbitrary>], iteration_bounds = array<i64: 1, 1, 1>, scalar_prefetch = 0 : i64, scratch_operands = 1 : i64, tpu.core_type = #tpu.core_type<tc>, window_params = [{transform_indices = @transform_0, window_bounds = array<i64: 16, 32>}, {transform_indices = @transform_1, window_bounds = array<i64: 32, 128>}, {transform_indices = @transform_2, window_bounds = array<i64: 1, 128>}, {transform_indices = @transform_3, window_bounds = array<i64: 128, 128>}, {transform_indices = @transform_4, window_bounds = array<i64: 1, 128>}, {transform_indices = @transform_5, window_bounds = array<i64: 16, 128>}]} {
    %c0_i32 = arith.constant 0 : i32
    %0 = arith.cmpi eq, %arg2, %c0_i32 : i32
    %1 = arith.extui %0 : i1 to i32
    %c0_i32_0 = arith.constant 0 : i32
    %2 = arith.cmpi ne, %1, %c0_i32_0 : i32
    scf.if %2 {
      %cst_17 = arith.constant 0.000000e+00 : f32
      %30 = vector.broadcast %cst_17 : f32 to vector<16x128xf32>
      %c0_18 = arith.constant 0 : index
      %c0_19 = arith.constant 0 : index
      %31 = vector.load %arg9[%c0_18, %c0_19] : memref<16x128xf32, #tpu.memory_space<vmem>>, vector<16x128xf32>
      tpu.vector_store %arg9[%c0_18, %c0_19], %30 {strides = array<i32>} : memref<16x128xf32, #tpu.memory_space<vmem>>, vector<16x128xf32>,
    } else {
    }
    %c0 = arith.constant 0 : index
    %c0_1 = arith.constant 0 : index
    %3 = vector.load %arg3[%c0, %c0_1] : memref<16x32xf32, #tpu.memory_space<vmem>>, vector<16x32xf32>
    %c0_2 = arith.constant 0 : index
    %c0_3 = arith.constant 0 : index
    %4 = vector.load %arg4[%c0_2, %c0_3] : memref<32x128xf32, #tpu.memory_space<vmem>>, vector<32x128xf32>
    %cst = arith.constant dense<0.000000e+00> : vector<16x128xf32>
    %5 = tpu.matmul %3, %4, %cst {dimension_numbers = #tpu.dot_dimension_numbers<[1], [0], [0], [1], [0, 0, 1, 1], [], []>} : vector<16x32xf32>, vector<32x128xf32>, vector<16x128xf32> -> vector<16x128xf32>
    %c0_4 = arith.constant 0 : index
    %c0_5 = arith.constant 0 : index
    %6 = vector.load %arg5[%c0_4, %c0_5] : memref<1x128xf32, #tpu.memory_space<vmem>>, vector<1x128xf32>
    %7 = vector.broadcast %6 : vector<1x128xf32> to vector<16x128xf32>
    %8 = arith.addf %5, %7 : vector<16x128xf32>
    %9 = arith.mulf %8, %8 : vector<16x128xf32>
    %10 = arith.mulf %8, %9 : vector<16x128xf32>
    %cst_6 = arith.constant 4.471500e-02 : f32
    %11 = vector.broadcast %cst_6 : f32 to vector<16x128xf32>
    %12 = arith.mulf %11, %10 : vector<16x128xf32>
    %13 = arith.addf %8, %12 : vector<16x128xf32>
    %cst_7 = arith.constant 0.797884583 : f32
    %14 = vector.broadcast %cst_7 : f32 to vector<16x128xf32>
    %15 = arith.mulf %14, %13 : vector<16x128xf32>
    %16 = math.tanh %15 : vector<16x128xf32>
    %cst_8 = arith.constant 1.000000e+00 : f32
    %17 = vector.broadcast %cst_8 : f32 to vector<16x128xf32>
    %18 = arith.addf %17, %16 : vector<16x128xf32>
    %cst_9 = arith.constant 5.000000e-01 : f32
    %19 = vector.broadcast %cst_9 : f32 to vector<16x128xf32>
    %20 = arith.mulf %19, %18 : vector<16x128xf32>
    %21 = arith.mulf %8, %20 : vector<16x128xf32>
    %c0_10 = arith.constant 0 : index
    %c0_11 = arith.constant 0 : index
    %22 = vector.load %arg6[%c0_10, %c0_11] : memref<128x128xf32, #tpu.memory_space<vmem>>, vector<128x128xf32>
    %cst_12 = arith.constant dense<0.000000e+00> : vector<16x128xf32>
    %23 = tpu.matmul %21, %22, %cst_12 {dimension_numbers = #tpu.dot_dimension_numbers<[1], [0], [0], [1], [0, 0, 1, 1], [], []>} : vector<16x128xf32>, vector<128x128xf32>, vector<16x128xf32> -> vector<16x128xf32>
    %c0_i32_13 = arith.constant 0 : i32
    %24 = arith.cmpi ne, %arg2, %c0_i32_13 : i32
    %25 = arith.extui %24 : i1 to i32
    %c0_i32_14 = arith.constant 0 : i32
    %26 = arith.cmpi ne, %25, %c0_i32_14 : i32
    scf.if %26 {
      %c0_17 = arith.constant 0 : index
      %c0_18 = arith.constant 0 : index
      %30 = vector.load %arg9[%c0_17, %c0_18] : memref<16x128xf32, #tpu.memory_space<vmem>>, vector<16x128xf32>
      %31 = arith.addf %30, %23 : vector<16x128xf32>
      %c0_19 = arith.constant 0 : index
      %c0_20 = arith.constant 0 : index
      %32 = vector.load %arg9[%c0_19, %c0_20] : memref<16x128xf32, #tpu.memory_space<vmem>>, vector<16x128xf32>
      tpu.vector_store %arg9[%c0_19, %c0_20], %31 {strides = array<i32>} : memref<16x128xf32, #tpu.memory_space<vmem>>, vector<16x128xf32>,
    } else {
    }
    %c0_i32_15 = arith.constant 0 : i32
    %27 = arith.cmpi eq, %arg2, %c0_i32_15 : i32
    %28 = arith.extui %27 : i1 to i32
    %c0_i32_16 = arith.constant 0 : i32
    %29 = arith.cmpi ne, %28, %c0_i32_16 : i32
    scf.if %29 {
      %c0_17 = arith.constant 0 : index
      %c0_18 = arith.constant 0 : index
      %30 = vector.load %arg9[%c0_17, %c0_18] : memref<16x128xf32, #tpu.memory_space<vmem>>, vector<16x128xf32>
      %31 = arith.addf %30, %23 : vector<16x128xf32>
      %c0_19 = arith.constant 0 : index
      %c0_20 = arith.constant 0 : index
      %32 = vector.load %arg7[%c0_19, %c0_20] : memref<1x128xf32, #tpu.memory_space<vmem>>, vector<1x128xf32>
      %33 = vector.broadcast %32 : vector<1x128xf32> to vector<16x128xf32>
      %34 = arith.addf %31, %33 : vector<16x128xf32>
      %c0_21 = arith.constant 0 : index
      %c0_22 = arith.constant 0 : index
      %35 = vector.load %arg8[%c0_21, %c0_22] : memref<16x128xf32, #tpu.memory_space<vmem>>, vector<16x128xf32>
      tpu.vector_store %arg8[%c0_21, %c0_22], %34 {strides = array<i32>} : memref<16x128xf32, #tpu.memory_space<vmem>>, vector<16x128xf32>,
    } else {
    }
    return
  }
  func.func @transform_0(%arg0: i32, %arg1: i32, %arg2: i32) -> (i32, i32) {
    %c0_i32 = arith.constant 0 : i32
    %c0_i32_0 = arith.constant 0 : i32
    return %arg0, %c0_i32 : i32, i32
  }
  func.func @transform_1(%arg0: i32, %arg1: i32, %arg2: i32) -> (i32, i32) {
    %c0_i32 = arith.constant 0 : i32
    %c0_i32_0 = arith.constant 0 : i32
    return %c0_i32, %arg2 : i32, i32
  }
  func.func @transform_2(%arg0: i32, %arg1: i32, %arg2: i32) -> (i32, i32) {
    %c0_i32 = arith.constant 0 : i32
    %c0_i32_0 = arith.constant 0 : i32
    return %c0_i32, %arg2 : i32, i32
  }
  func.func @transform_3(%arg0: i32, %arg1: i32, %arg2: i32) -> (i32, i32) {
    %c0_i32 = arith.constant 0 : i32
    return %arg2, %arg1 : i32, i32
  }
  func.func @transform_4(%arg0: i32, %arg1: i32, %arg2: i32) -> (i32, i32) {
    %c0_i32 = arith.constant 0 : i32
    %c0_i32_0 = arith.constant 0 : i32
    return %c0_i32, %arg1 : i32, i32
  }
  func.func @transform_5(%arg0: i32, %arg1: i32, %arg2: i32) -> (i32, i32) {
    %c0_i32 = arith.constant 0 : i32
    return %arg0, %arg1 : i32, i32
  }
}

</mosaic_0001>

<llo_original>
// kernel: tpu_custom_call.1
$region0: #{tpu_custom_call.1}
  #allocation0 [shape = 'u32[]', space=smem, size = 0x4, offset = 0x4, fixed_abs, tag = 'smem constant byte address 0x4 - core index']
  #allocation1 [shape = 'u32[72,128]{1,0:T(1,128)}', space=vmem, size = 0x9000, scoped, tag = 'internal scratch']
  #allocation2 [shape = 'f32[16,128]{1,0:T(8,128)}', space=vmem, size = 0x2000, scoped, tag = 'scratch operand']
  %s0 = inlined_call_operand.hbm [shape: f32[16,32], index: 0, kind: input, shape index: {}]
  %s1 = inlined_call_operand.hbm [shape: f32[32,128], index: 1, kind: input, shape index: {}]
  %s2 = inlined_call_operand.vmem [shape: f32[1,128], index: 2, kind: input, shape index: {}]
  %s3 = inlined_call_operand.hbm [shape: f32[128,128], index: 3, kind: input, shape index: {}]
  %s4 = inlined_call_operand.vmem [shape: f32[1,128], index: 4, kind: input, shape index: {}]
  %s5 = inlined_call_operand.hbm [shape: f32[16,128], index: 5, kind: output, shape index: {}]
  %s6 = sld [smem:[#allocation0]]
  $region54: #{tpu_custom_call.1} parent=0
    _
  %s8 = ssub.s32 1, %s6
  %s9 = scalar_select 0, %s8, %s6
  $region1: #{tpu_custom_call.1} parent=0
    #allocation3 [shape = 'u8[8192]{0}', space=vmem, size = 0x2000, scoped, tag = 'input window, operand 0, single buffered']
    #allocation4 [shape = 's32[1]{0}', space=sflag, size = 0x4, scoped, tag = 'scoped memory for tpu_custom_call.1']
    #allocation5 [shape = 's32[1]{0}', space=sflag, size = 0x4, scoped, tag = 'scoped memory for tpu_custom_call.1']
    #allocation6 [shape = 'u8[16384]{0}', space=vmem, size = 0x4000, scoped, tag = 'input window, operand 1, single buffered']
    #allocation7 [shape = 's32[1]{0}', space=sflag, size = 0x4, scoped, tag = 'scoped memory for tpu_custom_call.1']
    #allocation8 [shape = 'u8[65536]{0}', space=vmem, size = 0x10000, scoped, tag = 'input window, operand 3, single buffered']
    #allocation9 [shape = 'u8[8192]{0}', space=vmem, size = 0x2000, scoped, tag = 'output window, operand 0, single buffered']
    %10 = vsyncpa [#allocation4], 0
    %11 = vsyncpa [#allocation7], 0
    %12 = vsyncpa [#allocation5], 0
    // Predicated region
    $region2: #{tpu_custom_call.1} parent=1 // pred_check
      _
    $region3: #{tpu_custom_call.1} parent=1 // pred_check_branch
      %14 = sbr.rel (0) target = $region5
    $region4: #{tpu_custom_call.1} parent=1 // pred_region
      %16 = vsyncadd [#allocation4], 0
      %s17 = sshll.u32 %s0, 4
      %s18 = int_to_ptr.hbm [resolvable:$true] %s17
      %s19 = sshll.u32 [#allocation3], 4
      %s20 = int_to_ptr.vmem [resolvable:$true] %s19
      %25 = dma.hbm_to_vmem [thread:$0]  %s18, 256, %s20, [#allocation4], 128, 128, 8
    $region5: #{tpu_custom_call.1} parent=1 // pred_fallthru
      _
    // Predicated region
    $region6: #{tpu_custom_call.1} parent=1 // pred_check
      _
    $region7: #{tpu_custom_call.1} parent=1 // pred_check_branch
      %27 = sbr.rel (0) target = $region9
    $region8: #{tpu_custom_call.1} parent=1 // pred_region
      %29 = vsyncadd [#allocation7], 0
      %s30 = sshll.u32 %s1, 4
      %s31 = int_to_ptr.hbm [resolvable:$true] %s30
      %s32 = sshll.u32 [#allocation6], 4
      %s33 = int_to_ptr.vmem [resolvable:$true] %s32
      %38 = dma.hbm_to_vmem [thread:$0]  %s31, 512, %s33, [#allocation7], 128, 128, 8
    $region9: #{tpu_custom_call.1} parent=1 // pred_fallthru
      _
    // Predicated region
    $region10: #{tpu_custom_call.1} parent=1 // pred_check
      _
    $region11: #{tpu_custom_call.1} parent=1 // pred_check_branch
      %40 = sbr.rel (0) target = $region13
    $region12: #{tpu_custom_call.1} parent=1 // pred_region
      _
    $region13: #{tpu_custom_call.1} parent=1 // pred_fallthru
      _
    // Predicated region
    $region14: #{tpu_custom_call.1} parent=1 // pred_check
      _
    $region15: #{tpu_custom_call.1} parent=1 // pred_check_branch
      %42 = sbr.rel (0) target = $region17
    $region16: #{tpu_custom_call.1} parent=1 // pred_region
      %44 = vsyncadd [#allocation7], 0
      %s45 = sshll.u32 %s3, 4
      %s46 = int_to_ptr.hbm [resolvable:$true] %s45
      %s47 = sshll.u32 [#allocation8], 4
      %s48 = int_to_ptr.vmem [resolvable:$true] %s47
      %53 = dma.hbm_to_vmem [thread:$0]  %s46, 2048, %s48, [#allocation7], 128, 128, 8
    $region17: #{tpu_custom_call.1} parent=1 // pred_fallthru
      _
    // Predicated region
    $region18: #{tpu_custom_call.1} parent=1 // pred_check
      _
    $region19: #{tpu_custom_call.1} parent=1 // pred_check_branch
      %55 = sbr.rel (0) target = $region21
    $region20: #{tpu_custom_call.1} parent=1 // pred_region
      _
    $region21: #{tpu_custom_call.1} parent=1 // pred_fallthru
      _
    // Predicated region
    $region22: #{tpu_custom_call.1} parent=1 // pred_check
      _
    $region23: #{tpu_custom_call.1} parent=1 // pred_check_branch
      %57 = sbr.rel (0) target = $region25
    $region24: #{tpu_custom_call.1} parent=1 // pred_region
      %59 = dma.done [#allocation4], 256
    $region25: #{tpu_custom_call.1} parent=1 // pred_fallthru
      _
    // Predicated region
    $region26: #{tpu_custom_call.1} parent=1 // pred_check
      _
    $region27: #{tpu_custom_call.1} parent=1 // pred_check_branch
      %61 = sbr.rel (0) target = $region29
    $region28: #{tpu_custom_call.1} parent=1 // pred_region
      %63 = dma.done [#allocation7], 512
    $region29: #{tpu_custom_call.1} parent=1 // pred_fallthru
      _
    // Predicated region
    $region30: #{tpu_custom_call.1} parent=1 // pred_check
      _
    $region31: #{tpu_custom_call.1} parent=1 // pred_check_branch
      %65 = sbr.rel (0) target = $region33
    $region32: #{tpu_custom_call.1} parent=1 // pred_region
      %67 = dma.done [#allocation7], 2048
    $region33: #{tpu_custom_call.1} parent=1 // pred_fallthru
      _
    %p68 = scmp.eq.s32.totalorder 0, 0
    // Predicated region
    $region34: #{tpu_custom_call.1} parent=1 // pred_check
      %p69 = pneg %p68
    $region35: #{tpu_custom_call.1} parent=1 // pred_check_branch
      %71 = sbr.rel (%p69) target = $region37
    $region36: #{tpu_custom_call.1} parent=1 // pred_region
      %72 = vst [vmem:[#allocation2] sm:$0xff] 0.0
      %73 = vst [vmem:[#allocation2 + $0x8] sm:$0xff] 0.0
    $region37: #{tpu_custom_call.1} parent=1 // pred_fallthru
      _
    %v74 = vld [vmem:[#allocation3] sm:$0xff]
    %v75 = vld [vmem:[#allocation3 + $0x8] sm:$0xff]
    %v76 = vld [vmem:[#allocation6] sm:$0xff]
    %v77 = vld [vmem:[#allocation6 + $0x8] sm:$0xff]
    %v78 = vld [vmem:[#allocation6 + $0x10] sm:$0xff]
    %v79 = vld [vmem:[#allocation6 + $0x18] sm:$0xff]
    %v80 = vld [vmem:[%s2] sm:$0x1]
    %v82 = vperm.slane %v80, 0
    %vm84 = vcmask 261120
    %v86 = vsel %vm84, %v74, 0
    %v89 = vsel %vm84, %v75, 0
    %91 = vmatpush.msra.mxu0 0.0
    %92 = vmatpush.msra.mxu0 0.0
    %93 = vmatpush.msra.mxu0 0.0
    %94 = vmatpush.msra.mxu0 0.0
    %95 = vmatpush.msra.mxu0 0.0
    %96 = vmatpush.msra.mxu0 0.0
    %97 = vmatpush.msra.mxu0 0.0
    %98 = vmatpush.msra.mxu0 0.0
    %99 = vmatpush.msra.mxu0 0.0
    %100 = vmatpush.msra.mxu0 0.0
    %101 = vmatpush.msra.mxu0 0.0
    %102 = vmatpush.msra.mxu0 0.0
    %103 = vmatpush.msra.mxu0 %v79
    %104 = vmatpush.msra.mxu0 %v78
    %105 = vmatpush.msra.mxu0 %v77
    %106 = vmatpush.msra.mxu0 %v76
    %107 = vmatmul.f32.gmra.mxu0 %v86
    %v108 = vpop.f32.mrf.mxu0
    %v109 = vadd.f32 %v82, %v108
    %110 = vmatmul.f32.gmra.mxu0 %v89
    %v111 = vpop.f32.mrf.mxu0
    %v112 = vadd.f32 %v82, %v111
    %113 = vdwg.mxu0
    %v114 = vmul.f32 %v109, %v109
    %v115 = vmul.f32 %v112, %v112
    %v116 = vmul.f32 %v109, %v114
    %v117 = vmul.f32 %v112, %v115
    %v118 = vmul.f32 %v116, 0.044715
    %v119 = vmul.f32 %v117, 0.044715
    %v120 = vadd.f32 %v109, %v118
    %v121 = vadd.f32 %v112, %v119
    %v122 = vmul.f32 %v120, 0.7978846
    %v123 = vmul.f32 %v121, 0.7978846
    %v124 = vtanh.pop %v122
    %v125 = vtanh.pop %v123
    %v126 = vadd.f32 %v124, 1.0
    %v127 = vadd.f32 %v125, 1.0
    %v128 = vmul.f32 %v126, 0.5
    %v129 = vmul.f32 %v127, 0.5
    %v130 = vmul.f32 %v109, %v128
    %v131 = vmul.f32 %v112, %v129
    %v132 = vld [vmem:[#allocation8] sm:$0xff]
    %v133 = vld [vmem:[#allocation8 + $0x8] sm:$0xff]
    %v134 = vld [vmem:[#allocation8 + $0x10] sm:$0xff]
    %v135 = vld [vmem:[#allocation8 + $0x18] sm:$0xff]
    %v136 = vld [vmem:[#allocation8 + $0x20] sm:$0xff]
    %v137 = vld [vmem:[#allocation8 + $0x28] sm:$0xff]
    %v138 = vld [vmem:[#allocation8 + $0x30] sm:$0xff]
    %v139 = vld [vmem:[#allocation8 + $0x38] sm:$0xff]
    %v140 = vld [vmem:[#allocation8 + $0x40] sm:$0xff]
    %v141 = vld [vmem:[#allocation8 + $0x48] sm:$0xff]
    %v142 = vld [vmem:[#allocation8 + $0x50] sm:$0xff]
    %v143 = vld [vmem:[#allocation8 + $0x58] sm:$0xff]
    %v144 = vld [vmem:[#allocation8 + $0x60] sm:$0xff]
    %v145 = vld [vmem:[#allocation8 + $0x68] sm:$0xff]
    %v146 = vld [vmem:[#allocation8 + $0x70] sm:$0xff]
    %v147 = vld [vmem:[#allocation8 + $0x78] sm:$0xff]
    %148 = vmatpush.msra.mxu0 %v147
    %149 = vmatpush.msra.mxu0 %v146
    %150 = vmatpush.msra.mxu0 %v145
    %151 = vmatpush.msra.mxu0 %v144
    %152 = vmatpush.msra.mxu0 %v143
    %153 = vmatpush.msra.mxu0 %v142
    %154 = vmatpush.msra.mxu0 %v141
    %155 = vmatpush.msra.mxu0 %v140
    %156 = vmatpush.msra.mxu0 %v139
    %157 = vmatpush.msra.mxu0 %v138
    %158 = vmatpush.msra.mxu0 %v137
    %159 = vmatpush.msra.mxu0 %v136
    %160 = vmatpush.msra.mxu0 %v135
    %161 = vmatpush.msra.mxu0 %v134
    %162 = vmatpush.msra.mxu0 %v133
    %163 = vmatpush.msra.mxu0 %v132
    %164 = vmatmul.f32.gmra.mxu0 %v130
    %v165 = vpop.f32.mrf.mxu0
    %v166 = vadd.f32 0.0, %v165
    %167 = vmatmul.f32.gmra.mxu0 %v131
    %v168 = vpop.f32.mrf.mxu0
    %v169 = vadd.f32 0.0, %v168
    %170 = vdwg.mxu0
    %p171 = scmp.ne.s32.totalorder 0, 0
    // Predicated region
    $region38: #{tpu_custom_call.1} parent=1 // pred_check
      %p172 = pneg %p171
    $region39: #{tpu_custom_call.1} parent=1 // pred_check_branch
      %174 = sbr.rel (%p172) target = $region41
    $region40: #{tpu_custom_call.1} parent=1 // pred_region
      %v175 = vld [vmem:[#allocation2] sm:$0xff]
      %v176 = vld [vmem:[#allocation2 + $0x8] sm:$0xff]
      %v177 = vadd.f32 %v175, %v166
      %v178 = vadd.f32 %v176, %v169
      %179 = vst [vmem:[#allocation2] sm:$0xff] %v177
      %180 = vst [vmem:[#allocation2 + $0x8] sm:$0xff] %v178
    $region41: #{tpu_custom_call.1} parent=1 // pred_fallthru
      _
    // Predicated region
    $region42: #{tpu_custom_call.1} parent=1 // pred_check
      %p181 = pneg %p68
    $region43: #{tpu_custom_call.1} parent=1 // pred_check_branch
      %183 = sbr.rel (%p181) target = $region45
    $region44: #{tpu_custom_call.1} parent=1 // pred_region
      %v184 = vld [vmem:[#allocation2] sm:$0xff]
      %v185 = vld [vmem:[#allocation2 + $0x8] sm:$0xff]
      %v186 = vadd.f32 %v184, %v166
      %v187 = vadd.f32 %v185, %v169
      %v188 = vld [vmem:[%s4] sm:$0x1]
      %v190 = vperm.slane %v188, 0
      %v192 = vadd.f32 %v186, %v190
      %v193 = vadd.f32 %v187, %v190
      %194 = vst [vmem:[#allocation9] sm:$0xff] %v192
      %195 = vst [vmem:[#allocation9 + $0x8] sm:$0xff] %v193
    $region45: #{tpu_custom_call.1} parent=1 // pred_fallthru
      _
    // Predicated region
    $region46: #{tpu_custom_call.1} parent=1 // pred_check
      _
    $region47: #{tpu_custom_call.1} parent=1 // pred_check_branch
      %197 = sbr.rel (0) target = $region49
    $region48: #{tpu_custom_call.1} parent=1 // pred_region
      %199 = vsyncadd [#allocation5], 0
      %s200 = sshll.u32 [#allocation9], 4
      %s201 = int_to_ptr.vmem [resolvable:$true] %s200
      %s202 = sshll.u32 %s5, 4
      %s203 = int_to_ptr.hbm [resolvable:$true] %s202
      %208 = dma.vmem_to_hbm [thread:$0]  %s201, 256, %s203, [#allocation5], 128, 128, 8
    $region49: #{tpu_custom_call.1} parent=1 // pred_fallthru
      _
    // Predicated region
    $region50: #{tpu_custom_call.1} parent=1 // pred_check
      _
    $region51: #{tpu_custom_call.1} parent=1 // pred_check_branch
      %210 = sbr.rel (0) target = $region53
    $region52: #{tpu_custom_call.1} parent=1 // pred_region
      %212 = dma.done [#allocation5], 256
    $region53: #{tpu_custom_call.1} parent=1 // pred_fallthru
      _
    %213 = vsyncpa [#allocation4], 1
    %214 = vsyncpa [#allocation7], 1
    %215 = vsyncpa [#allocation5], 1

</llo_original>
